<compile_context>
chip_gen: v7x
topology: tpu7x:2x2x1
jax: 0.10.0
libtpu: 0.0.40
codegen_flags: <defaults>
</compile_context>

<pallas_src>
import functools

import jax
import jax.numpy as jnp
from jax.experimental import pallas as pl
from jax.experimental.pallas import tpu as pltpu

# ----------------------------- configuration ------------------------------
B = 2                 # batch
T = 16                # time steps
BT = B * T            # batch folded into the lane (time) axis
LANES = 128           # lane-dense padding of the folded axis
CQ = 8                # wavenet out_channels (quantization classes)
CC = 4                # conditioning classes (one_hot_z channel dim)
R = 8                 # residual channels
G = 8                 # gate channels (per tanh / sigmoid branch)
S = 8                 # skip channels
DILATIONS = (1, 2, 4)
L = len(DILATIONS)
STK = 2 * R + CC      # rows of the fused gate operand [h; h_shift; c]
WROWS = 16            # max output rows of any packed weight (= 2G = S+R)
WCOLS = 128           # packed weight slab padded to one full lane tile


def _offsets():
    o, off = 0, {}

    def take(name, n):
        nonlocal o
        off[name] = o
        o += n

    take("w_in", CQ)
    take("w_gate", L * STK)
    take("w_sr", L * G)
    take("w_out1", S)
    take("w_out2", S)
    take("b_in", 1)
    take("b_gate", L)
    take("b_sr", L)
    take("b_out1", 1)
    take("b_out2", 1)
    off["_total"] = o
    return off


OFF = _offsets()
assert OFF["_total"] <= WCOLS


# ------------------------------- kernel -----------------------------------
def wavenet_decoder_kernel(x_ref, c_ref, w_ref, o_ref, stk_ref):
    dot = functools.partial(jnp.dot, preferred_element_type=jnp.float32)

    def wslice(name, rows, width, l=0):
        col = OFF[name] + l * width
        return w_ref[0:rows, col:col + width]

    # Front 1x1 conv on one_hot(x): one-hot built in-kernel from int indices.
    q_iota = jax.lax.broadcasted_iota(jnp.int32, (CQ, LANES), 0)
    one_hot_x = (q_iota == x_ref[...]).astype(jnp.float32)        # (CQ, LANES)
    h = dot(wslice("w_in", R, CQ), one_hot_x) + wslice("b_in", R, 1)

    # Conditioning block of the fused gate operand: written once (persistent).
    stk_ref[2 * R:2 * R + CC, :] = c_ref[...]

    # Local (within-batch-segment) time index of every lane.
    t_loc = jax.lax.broadcasted_iota(jnp.int32, (R, LANES), 1) % T
    skip = jnp.zeros((S, LANES), jnp.float32)

    # Dilated gated residual stack (unrolled; dilations are static).
    for l, d in enumerate(DILATIONS):
        # Causal shift by d within each length-T segment: XLU lane rotation;
        # the mask zeroes the wrapped-around lanes (incl. cross-batch leaks).
        h_shift = jnp.where(t_loc >= d, pltpu.roll(h, shift=d, axis=1), 0.0)

        # Fused gate matmul [W1 | W0 | Wc] @ [h; h_shift; c] + (b_dil+b_cond).
        # (v7x alternative: 3 MRB-accumulating matmuls, no staging.)
        stk_ref[0:R, :] = h
        stk_ref[R:2 * R, :] = h_shift
        pre = (dot(wslice("w_gate", 2 * G, STK, l), stk_ref[...])
               + wslice("b_gate", 2 * G, 1, l))                    # (2G, LANES)
        z = jnp.tanh(pre[:G]) * jax.nn.sigmoid(pre[G:])            # (G, LANES)

        # Fused skip/residual matmul [[Wskip]; [Wres]] @ z + [bskip; bres].
        sr = dot(wslice("w_sr", S + R, G, l), z) + wslice("b_sr", S + R, 1, l)
        skip = skip + sr[:S]
        h = h + sr[S:]

    # Output head (plain broadcast bias adds).
    h1 = jax.nn.relu(dot(wslice("w_out1", S, S), jax.nn.relu(skip))
                     + wslice("b_out1", S, 1))                     # (S, LANES)
    logits = dot(wslice("w_out2", CQ, S), h1) + wslice("b_out2", CQ, 1)

    # Softmax over channels; divide on the EUP via approx reciprocal.
    m = jnp.max(logits, axis=0, keepdims=True)
    e = jnp.exp(logits - m)
    probs = e * pl.reciprocal(jnp.sum(e, axis=0, keepdims=True), approx=True)

    # Decoder right-shift within each batch segment; ones at local t == 0.
    t_loc_q = jax.lax.broadcasted_iota(jnp.int32, (CQ, LANES), 1) % T
    o_ref[...] = jnp.where(t_loc_q == 0, 1.0,
                           pltpu.roll(probs, shift=1, axis=1))


# ------------------------------- packing -----------------------------------
def pack_params(p):
    """Pack the 14 raw weight/bias arrays into one (WROWS, WCOLS) f32 slab."""
    slab = jnp.zeros((WROWS, WCOLS), jnp.float32)

    def put(slab, name, mat, l=None):
        rows, width = mat.shape
        col = OFF[name] + (0 if l is None else l * width)
        return slab.at[:rows, col:col + width].set(mat.astype(jnp.float32))

    slab = put(slab, "w_in", p["w_in"])
    slab = put(slab, "b_in", p["b_in"])
    for l in range(L):
        w_gate = jnp.concatenate(                 # [W1 | W0 | Wc]  (2G, STK)
            [p["w_dil"][l, 1], p["w_dil"][l, 0], p["w_cond"][l]], axis=1)
        slab = put(slab, "w_gate", w_gate, l)
        slab = put(slab, "b_gate", p["b_dil"][l] + p["b_cond"][l], l)
        w_sr = jnp.concatenate([p["w_skip"][l], p["w_res"][l]], axis=0)
        slab = put(slab, "w_sr", w_sr, l)
        slab = put(slab, "b_sr",
                   jnp.concatenate([p["b_skip"][l], p["b_res"][l]], axis=0), l)
    slab = put(slab, "w_out1", p["w_out1"])
    slab = put(slab, "b_out1", p["b_out1"])
    slab = put(slab, "w_out2", p["w_out2"])
    slab = put(slab, "b_out2", p["b_out2"])
    return slab


# ------------------------------- wrapper -----------------------------------
@jax.jit
def better_wavenet_decoder(one_hot_z, x_idx, w_slab):
    """one_hot_z: (B, CC, T) f32, x_idx: (B, T) int, w_slab: packed weights.

    Returns p_x: (B, CQ, T) f32.
    """
    # Fold batch into the lane axis and pad to 128 lanes (lane-dense).
    c = jnp.transpose(one_hot_z, (1, 0, 2)).reshape(CC, BT).astype(jnp.float32)
    c = jnp.pad(c, ((0, 0), (0, LANES - BT)))
    xi = jnp.pad(x_idx.reshape(1, BT).astype(jnp.int32),
                 ((0, 0), (0, LANES - BT)))

    out = pl.pallas_call(
        wavenet_decoder_kernel,
        out_shape=jax.ShapeDtypeStruct((CQ, LANES), jnp.float32),
        scratch_shapes=[pltpu.VMEM((STK, LANES), jnp.float32)],
    )(xi, c, w_slab)                                              # (CQ, 128)

    return jnp.transpose(out[:, :BT].reshape(CQ, B, T), (1, 0, 2))


# --------------------------- reference (pure JAX) ---------------------------
def reference(one_hot_z, x_idx, p):
    x = jax.nn.one_hot(x_idx, CQ, axis=1, dtype=jnp.float32)   # (B, CQ, T)
    c = one_hot_z
    mm = lambda w, a: jnp.einsum("oi,bit->bot", w, a)
    h = mm(p["w_in"], x) + p["b_in"][None]
    skip = jnp.zeros((B, S, T), jnp.float32)
    for l, d in enumerate(DILATIONS):
        h_shift = jnp.concatenate(
            [jnp.zeros((B, R, d), jnp.float32), h[:, :, :T - d]], axis=-1)
        pre = (mm(p["w_dil"][l, 1], h) + mm(p["w_dil"][l, 0], h_shift)
               + p["b_dil"][l][None]
               + mm(p["w_cond"][l], c) + p["b_cond"][l][None])
        z = jnp.tanh(pre[:, :G]) * jax.nn.sigmoid(pre[:, G:])
        skip = skip + mm(p["w_skip"][l], z) + p["b_skip"][l][None]
        h = h + mm(p["w_res"][l], z) + p["b_res"][l][None]
    out = jax.nn.relu(skip)
    out = jax.nn.relu(mm(p["w_out1"], out) + p["b_out1"][None])
    logits = mm(p["w_out2"], out) + p["b_out2"][None]
    probs = jax.nn.softmax(logits, axis=1)
    return jnp.concatenate(
        [jnp.ones((B, CQ, 1), jnp.float32), probs[:, :, :T - 1]], axis=-1)


# --------------------------------- main ------------------------------------
def init_params(key):
    ks = jax.random.split(key, 14)
    n = lambda k, shape: 0.1 * jax.random.normal(k, shape, jnp.float32)
    return {
        "w_in":   n(ks[0],  (R, CQ)),       "b_in":   n(ks[1],  (R, 1)),
        "w_dil":  n(ks[2],  (L, 2, 2 * G, R)),
        "b_dil":  n(ks[3],  (L, 2 * G, 1)),
        "w_cond": n(ks[4],  (L, 2 * G, CC)),
        "b_cond": n(ks[5],  (L, 2 * G, 1)),
        "w_skip": n(ks[6],  (L, S, G)),     "b_skip": n(ks[7],  (L, S, 1)),
        "w_res":  n(ks[8],  (L, R, G)),     "b_res":  n(ks[9],  (L, R, 1)),
        "w_out1": n(ks[10], (S, S)),        "b_out1": n(ks[11], (S, 1)),
        "w_out2": n(ks[12], (CQ, S)),       "b_out2": n(ks[13], (CQ, 1)),
    }


if __name__ == "__main__":
    key = jax.random.PRNGKey(0)
    k_p, k_x, k_z = jax.random.split(key, 3)

    params = init_params(k_p)
    x_idx = jax.random.randint(k_x, (B, T), 0, CQ, dtype=jnp.int32)
    z_idx = jax.random.randint(k_z, (B, T), 0, CC, dtype=jnp.int32)
    one_hot_z = jax.nn.one_hot(z_idx, CC, axis=1, dtype=jnp.float32)  # (B,CC,T)

    # Weights packed ONCE, outside the per-call (jit) path.
    w_slab = pack_params(params)

    p_x = better_wavenet_decoder(one_hot_z, x_idx, w_slab)
    p_x = jax.block_until_ready(p_x)

    ref = reference(one_hot_z, x_idx, params)
    assert p_x.shape == (B, CQ, T)
    assert jnp.allclose(p_x, ref, rtol=1e-3, atol=1e-3)

    print("KERNEL_OK")
</pallas_src>

<mosaic_0001>
module attributes {stable_mosaic.version = 11 : i64} {
  func.func @wavenet_decoder_kernel(%arg0: memref<1x128xi32, #tpu.memory_space<vmem>>, %arg1: memref<4x128xf32, #tpu.memory_space<vmem>>, %arg2: memref<16x128xf32, #tpu.memory_space<vmem>>, %arg3: memref<8x128xf32, #tpu.memory_space<vmem>>, %arg4: memref<20x128xf32, #tpu.memory_space<vmem>>) attributes {dimension_semantics = [], scalar_prefetch = 0 : i64, scratch_operands = 1 : i64, tpu.core_type = #tpu.core_type<tc>} {
    %0 = tpu.iota {dimensions = array<i32: 0>} : vector<8x128xi32>
    %c0 = arith.constant 0 : index
    %c0_0 = arith.constant 0 : index
    %1 = vector.load %arg0[%c0, %c0_0] : memref<1x128xi32, #tpu.memory_space<vmem>>, vector<1x128xi32>
    %2 = vector.broadcast %1 : vector<1x128xi32> to vector<8x128xi32>
    %3 = arith.cmpi eq, %0, %2 : vector<8x128xi32>
    %4 = arith.extui %3 : vector<8x128xi1> to vector<8x128xi32>
    %5 = arith.sitofp %4 : vector<8x128xi32> to vector<8x128xf32>
    %c0_1 = arith.constant 0 : index
    %c0_2 = arith.constant 0 : index
    %6 = vector.load %arg2[%c0_1, %c0_2] : memref<16x128xf32, #tpu.memory_space<vmem>>, vector<8x8xf32>
    %cst = arith.constant dense<0.000000e+00> : vector<8x128xf32>
    %7 = tpu.matmul %6, %5, %cst {dimension_numbers = #tpu.dot_dimension_numbers<[1], [0], [0], [1], [0, 0, 1, 1], [], []>} : vector<8x8xf32>, vector<8x128xf32>, vector<8x128xf32> -> vector<8x128xf32>
    %c0_3 = arith.constant 0 : index
    %c108 = arith.constant 108 : index
    %8 = vector.load %arg2[%c0_3, %c108] : memref<16x128xf32, #tpu.memory_space<vmem>>, vector<8x1xf32>
    %9 = vector.broadcast %8 : vector<8x1xf32> to vector<8x128xf32>
    %10 = arith.addf %7, %9 : vector<8x128xf32>
    %c0_4 = arith.constant 0 : index
    %c0_5 = arith.constant 0 : index
    %11 = vector.load %arg1[%c0_4, %c0_5] : memref<4x128xf32, #tpu.memory_space<vmem>>, vector<4x128xf32>
    %c16 = arith.constant 16 : index
    %c0_6 = arith.constant 0 : index
    %12 = vector.load %arg4[%c16, %c0_6] : memref<20x128xf32, #tpu.memory_space<vmem>>, vector<4x128xf32>
    tpu.vector_store %arg4[%c16, %c0_6], %11 {strides = array<i32>} : memref<20x128xf32, #tpu.memory_space<vmem>>, vector<4x128xf32>,
    %13 = tpu.iota {dimensions = array<i32: 1>} : vector<8x128xi32>
    %c16_i32 = arith.constant 16 : i32
    %c0_i32 = arith.constant 0 : i32
    %14 = arith.cmpi eq, %c16_i32, %c0_i32 : i32
    %c1_i32 = arith.constant 1 : i32
    %15 = arith.select %14, %c1_i32, %c16_i32 : i32
    %16 = vector.broadcast %15 : i32 to vector<8x128xi32>
    %17 = arith.remsi %13, %16 : vector<8x128xi32>
    %c0_i32_7 = arith.constant 0 : i32
    %18 = vector.broadcast %c0_i32_7 : i32 to vector<8x128xi32>
    %19 = arith.cmpi ne, %17, %18 : vector<8x128xi32>
    %c0_i32_8 = arith.constant 0 : i32
    %20 = vector.broadcast %c0_i32_8 : i32 to vector<8x128xi32>
    %21 = arith.cmpi slt, %17, %20 : vector<8x128xi32>
    %c0_i32_9 = arith.constant 0 : i32
    %22 = arith.cmpi slt, %15, %c0_i32_9 : i32
    %23 = vector.broadcast %22 : i1 to vector<8x128xi1>
    %24 = vector.broadcast %23 : vector<8x128xi1> to vector<8x128xi1>
    %25 = arith.xori %21, %24 : vector<8x128xi1>
    %26 = arith.andi %25, %19 : vector<8x128xi1>
    %27 = vector.broadcast %15 : i32 to vector<8x128xi32>
    %28 = arith.addi %17, %27 : vector<8x128xi32>
    %29 = arith.select %26, %28, %17 : vector<8x128xi1>, vector<8x128xi32>
    %cst_10 = arith.constant 0.000000e+00 : f32
    %30 = vector.broadcast %cst_10 : f32 to vector<8x128xf32>
    %c1_i32_11 = arith.constant 1 : i32
    %31 = vector.broadcast %c1_i32_11 : i32 to vector<8x128xi32>
    %32 = arith.cmpi sge, %29, %31 : vector<8x128xi32>
    %c1_i32_12 = arith.constant 1 : i32
    %33 = tpu.dynamic_rotate %10 by %c1_i32_12 dim 1 : vector<8x128xf32>, i32 -> vector<8x128xf32>
    %cst_13 = arith.constant 0.000000e+00 : f32
    %34 = vector.broadcast %cst_13 : f32 to vector<8x128xf32>
    %35 = arith.select %32, %33, %34 : vector<8x128xi1>, vector<8x128xf32>
    %c0_14 = arith.constant 0 : index
    %c0_15 = arith.constant 0 : index
    %36 = vector.load %arg4[%c0_14, %c0_15] : memref<20x128xf32, #tpu.memory_space<vmem>>, vector<8x128xf32>
    tpu.vector_store %arg4[%c0_14, %c0_15], %10 {strides = array<i32>} : memref<20x128xf32, #tpu.memory_space<vmem>>, vector<8x128xf32>,
    %c8 = arith.constant 8 : index
    %c0_16 = arith.constant 0 : index
    %37 = vector.load %arg4[%c8, %c0_16] : memref<20x128xf32, #tpu.memory_space<vmem>>, vector<8x128xf32>
    tpu.vector_store %arg4[%c8, %c0_16], %35 {strides = array<i32>} : memref<20x128xf32, #tpu.memory_space<vmem>>, vector<8x128xf32>,
    %c0_17 = arith.constant 0 : index
    %c8_18 = arith.constant 8 : index
    %38 = vector.load %arg2[%c0_17, %c8_18] : memref<16x128xf32, #tpu.memory_space<vmem>>, vector<16x20xf32>
    %c0_19 = arith.constant 0 : index
    %c0_20 = arith.constant 0 : index
    %39 = vector.load %arg4[%c0_19, %c0_20] : memref<20x128xf32, #tpu.memory_space<vmem>>, vector<20x128xf32>
    %cst_21 = arith.constant dense<0.000000e+00> : vector<16x128xf32>
    %40 = tpu.matmul %38, %39, %cst_21 {dimension_numbers = #tpu.dot_dimension_numbers<[1], [0], [0], [1], [0, 0, 1, 1], [], []>} : vector<16x20xf32>, vector<20x128xf32>, vector<16x128xf32> -> vector<16x128xf32>
    %c0_22 = arith.constant 0 : index
    %c109 = arith.constant 109 : index
    %41 = vector.load %arg2[%c0_22, %c109] : memref<16x128xf32, #tpu.memory_space<vmem>>, vector<16x1xf32>
    %42 = vector.broadcast %41 : vector<16x1xf32> to vector<16x128xf32>
    %43 = arith.addf %40, %42 : vector<16x128xf32>
    %44 = vector.extract_strided_slice %43 {offsets = [0, 0], sizes = [8, 128], strides = [1, 1]} : vector<16x128xf32> to vector<8x128xf32>
    %45 = math.tanh %44 : vector<8x128xf32>
    %46 = vector.extract_strided_slice %43 {offsets = [8, 0], sizes = [8, 128], strides = [1, 1]} : vector<16x128xf32> to vector<8x128xf32>
    %47 = arith.negf %46 : vector<8x128xf32>
    %48 = math.exp %47 : vector<8x128xf32>
    %cst_23 = arith.constant 1.000000e+00 : f32
    %49 = vector.broadcast %cst_23 : f32 to vector<8x128xf32>
    %50 = arith.addf %49, %48 : vector<8x128xf32>
    %51 = arith.divf %49, %50 : vector<8x128xf32>
    %52 = arith.mulf %45, %51 : vector<8x128xf32>
    %c0_24 = arith.constant 0 : index
    %c68 = arith.constant 68 : index
    %53 = vector.load %arg2[%c0_24, %c68] : memref<16x128xf32, #tpu.memory_space<vmem>>, vector<16x8xf32>
    %cst_25 = arith.constant dense<0.000000e+00> : vector<16x128xf32>
    %54 = tpu.matmul %53, %52, %cst_25 {dimension_numbers = #tpu.dot_dimension_numbers<[1], [0], [0], [1], [0, 0, 1, 1], [], []>} : vector<16x8xf32>, vector<8x128xf32>, vector<16x128xf32> -> vector<16x128xf32>
    %c0_26 = arith.constant 0 : index
    %c112 = arith.constant 112 : index
    %55 = vector.load %arg2[%c0_26, %c112] : memref<16x128xf32, #tpu.memory_space<vmem>>, vector<16x1xf32>
    %56 = vector.broadcast %55 : vector<16x1xf32> to vector<16x128xf32>
    %57 = arith.addf %54, %56 : vector<16x128xf32>
    %58 = vector.extract_strided_slice %57 {offsets = [0, 0], sizes = [8, 128], strides = [1, 1]} : vector<16x128xf32> to vector<8x128xf32>
    %59 = arith.addf %30, %58 : vector<8x128xf32>
    %60 = vector.extract_strided_slice %57 {offsets = [8, 0], sizes = [8, 128], strides = [1, 1]} : vector<16x128xf32> to vector<8x128xf32>
    %61 = arith.addf %10, %60 : vector<8x128xf32>
    %c2_i32 = arith.constant 2 : i32
    %62 = vector.broadcast %c2_i32 : i32 to vector<8x128xi32>
    %63 = arith.cmpi sge, %29, %62 : vector<8x128xi32>
    %c2_i32_27 = arith.constant 2 : i32
    %64 = tpu.dynamic_rotate %61 by %c2_i32_27 dim 1 : vector<8x128xf32>, i32 -> vector<8x128xf32>
    %cst_28 = arith.constant 0.000000e+00 : f32
    %65 = vector.broadcast %cst_28 : f32 to vector<8x128xf32>
    %66 = arith.select %63, %64, %65 : vector<8x128xi1>, vector<8x128xf32>
    %c0_29 = arith.constant 0 : index
    %c0_30 = arith.constant 0 : index
    %67 = vector.load %arg4[%c0_29, %c0_30] : memref<20x128xf32, #tpu.memory_space<vmem>>, vector<8x128xf32>
    tpu.vector_store %arg4[%c0_29, %c0_30], %61 {strides = array<i32>} : memref<20x128xf32, #tpu.memory_space<vmem>>, vector<8x128xf32>,
    %c8_31 = arith.constant 8 : index
    %c0_32 = arith.constant 0 : index
    %68 = vector.load %arg4[%c8_31, %c0_32] : memref<20x128xf32, #tpu.memory_space<vmem>>, vector<8x128xf32>
    tpu.vector_store %arg4[%c8_31, %c0_32], %66 {strides = array<i32>} : memref<20x128xf32, #tpu.memory_space<vmem>>, vector<8x128xf32>,
    %c0_33 = arith.constant 0 : index
    %c28 = arith.constant 28 : index
    %69 = vector.load %arg2[%c0_33, %c28] : memref<16x128xf32, #tpu.memory_space<vmem>>, vector<16x20xf32>
    %c0_34 = arith.constant 0 : index
    %c0_35 = arith.constant 0 : index
    %70 = vector.load %arg4[%c0_34, %c0_35] : memref<20x128xf32, #tpu.memory_space<vmem>>, vector<20x128xf32>
    %cst_36 = arith.constant dense<0.000000e+00> : vector<16x128xf32>
    %71 = tpu.matmul %69, %70, %cst_36 {dimension_numbers = #tpu.dot_dimension_numbers<[1], [0], [0], [1], [0, 0, 1, 1], [], []>} : vector<16x20xf32>, vector<20x128xf32>, vector<16x128xf32> -> vector<16x128xf32>
    %c0_37 = arith.constant 0 : index
    %c110 = arith.constant 110 : index
    %72 = vector.load %arg2[%c0_37, %c110] : memref<16x128xf32, #tpu.memory_space<vmem>>, vector<16x1xf32>
    %73 = vector.broadcast %72 : vector<16x1xf32> to vector<16x128xf32>
    %74 = arith.addf %71, %73 : vector<16x128xf32>
    %75 = vector.extract_strided_slice %74 {offsets = [0, 0], sizes = [8, 128], strides = [1, 1]} : vector<16x128xf32> to vector<8x128xf32>
    %76 = math.tanh %75 : vector<8x128xf32>
    %77 = vector.extract_strided_slice %74 {offsets = [8, 0], sizes = [8, 128], strides = [1, 1]} : vector<16x128xf32> to vector<8x128xf32>
    %78 = arith.negf %77 : vector<8x128xf32>
    %79 = math.exp %78 : vector<8x128xf32>
    %cst_38 = arith.constant 1.000000e+00 : f32
    %80 = vector.broadcast %cst_38 : f32 to vector<8x128xf32>
    %81 = arith.addf %80, %79 : vector<8x128xf32>
    %82 = arith.divf %80, %81 : vector<8x128xf32>
    %83 = arith.mulf %76, %82 : vector<8x128xf32>
    %c0_39 = arith.constant 0 : index
    %c76 = arith.constant 76 : index
    %84 = vector.load %arg2[%c0_39, %c76] : memref<16x128xf32, #tpu.memory_space<vmem>>, vector<16x8xf32>
    %cst_40 = arith.constant dense<0.000000e+00> : vector<16x128xf32>
    %85 = tpu.matmul %84, %83, %cst_40 {dimension_numbers = #tpu.dot_dimension_numbers<[1], [0], [0], [1], [0, 0, 1, 1], [], []>} : vector<16x8xf32>, vector<8x128xf32>, vector<16x128xf32> -> vector<16x128xf32>
    %c0_41 = arith.constant 0 : index
    %c113 = arith.constant 113 : index
    %86 = vector.load %arg2[%c0_41, %c113] : memref<16x128xf32, #tpu.memory_space<vmem>>, vector<16x1xf32>
    %87 = vector.broadcast %86 : vector<16x1xf32> to vector<16x128xf32>
    %88 = arith.addf %85, %87 : vector<16x128xf32>
    %89 = vector.extract_strided_slice %88 {offsets = [0, 0], sizes = [8, 128], strides = [1, 1]} : vector<16x128xf32> to vector<8x128xf32>
    %90 = arith.addf %59, %89 : vector<8x128xf32>
    %91 = vector.extract_strided_slice %88 {offsets = [8, 0], sizes = [8, 128], strides = [1, 1]} : vector<16x128xf32> to vector<8x128xf32>
    %92 = arith.addf %61, %91 : vector<8x128xf32>
    %c4_i32 = arith.constant 4 : i32
    %93 = vector.broadcast %c4_i32 : i32 to vector<8x128xi32>
    %94 = arith.cmpi sge, %29, %93 : vector<8x128xi32>
    %c4_i32_42 = arith.constant 4 : i32
    %95 = tpu.dynamic_rotate %92 by %c4_i32_42 dim 1 : vector<8x128xf32>, i32 -> vector<8x128xf32>
    %cst_43 = arith.constant 0.000000e+00 : f32
    %96 = vector.broadcast %cst_43 : f32 to vector<8x128xf32>
    %97 = arith.select %94, %95, %96 : vector<8x128xi1>, vector<8x128xf32>
    %c0_44 = arith.constant 0 : index
    %c0_45 = arith.constant 0 : index
    %98 = vector.load %arg4[%c0_44, %c0_45] : memref<20x128xf32, #tpu.memory_space<vmem>>, vector<8x128xf32>
    tpu.vector_store %arg4[%c0_44, %c0_45], %92 {strides = array<i32>} : memref<20x128xf32, #tpu.memory_space<vmem>>, vector<8x128xf32>,
    %c8_46 = arith.constant 8 : index
    %c0_47 = arith.constant 0 : index
    %99 = vector.load %arg4[%c8_46, %c0_47] : memref<20x128xf32, #tpu.memory_space<vmem>>, vector<8x128xf32>
    tpu.vector_store %arg4[%c8_46, %c0_47], %97 {strides = array<i32>} : memref<20x128xf32, #tpu.memory_space<vmem>>, vector<8x128xf32>,
    %c0_48 = arith.constant 0 : index
    %c48 = arith.constant 48 : index
    %100 = vector.load %arg2[%c0_48, %c48] : memref<16x128xf32, #tpu.memory_space<vmem>>, vector<16x20xf32>
    %c0_49 = arith.constant 0 : index
    %c0_50 = arith.constant 0 : index
    %101 = vector.load %arg4[%c0_49, %c0_50] : memref<20x128xf32, #tpu.memory_space<vmem>>, vector<20x128xf32>
    %cst_51 = arith.constant dense<0.000000e+00> : vector<16x128xf32>
    %102 = tpu.matmul %100, %101, %cst_51 {dimension_numbers = #tpu.dot_dimension_numbers<[1], [0], [0], [1], [0, 0, 1, 1], [], []>} : vector<16x20xf32>, vector<20x128xf32>, vector<16x128xf32> -> vector<16x128xf32>
    %c0_52 = arith.constant 0 : index
    %c111 = arith.constant 111 : index
    %103 = vector.load %arg2[%c0_52, %c111] : memref<16x128xf32, #tpu.memory_space<vmem>>, vector<16x1xf32>
    %104 = vector.broadcast %103 : vector<16x1xf32> to vector<16x128xf32>
    %105 = arith.addf %102, %104 : vector<16x128xf32>
    %106 = vector.extract_strided_slice %105 {offsets = [0, 0], sizes = [8, 128], strides = [1, 1]} : vector<16x128xf32> to vector<8x128xf32>
    %107 = math.tanh %106 : vector<8x128xf32>
    %108 = vector.extract_strided_slice %105 {offsets = [8, 0], sizes = [8, 128], strides = [1, 1]} : vector<16x128xf32> to vector<8x128xf32>
    %109 = arith.negf %108 : vector<8x128xf32>
    %110 = math.exp %109 : vector<8x128xf32>
    %cst_53 = arith.constant 1.000000e+00 : f32
    %111 = vector.broadcast %cst_53 : f32 to vector<8x128xf32>
    %112 = arith.addf %111, %110 : vector<8x128xf32>
    %113 = arith.divf %111, %112 : vector<8x128xf32>
    %114 = arith.mulf %107, %113 : vector<8x128xf32>
    %c0_54 = arith.constant 0 : index
    %c84 = arith.constant 84 : index
    %115 = vector.load %arg2[%c0_54, %c84] : memref<16x128xf32, #tpu.memory_space<vmem>>, vector<16x8xf32>
    %cst_55 = arith.constant dense<0.000000e+00> : vector<16x128xf32>
    %116 = tpu.matmul %115, %114, %cst_55 {dimension_numbers = #tpu.dot_dimension_numbers<[1], [0], [0], [1], [0, 0, 1, 1], [], []>} : vector<16x8xf32>, vector<8x128xf32>, vector<16x128xf32> -> vector<16x128xf32>
    %c0_56 = arith.constant 0 : index
    %c114 = arith.constant 114 : index
    %117 = vector.load %arg2[%c0_56, %c114] : memref<16x128xf32, #tpu.memory_space<vmem>>, vector<16x1xf32>
    %118 = vector.broadcast %117 : vector<16x1xf32> to vector<16x128xf32>
    %119 = arith.addf %116, %118 : vector<16x128xf32>
    %120 = vector.extract_strided_slice %119 {offsets = [0, 0], sizes = [8, 128], strides = [1, 1]} : vector<16x128xf32> to vector<8x128xf32>
    %121 = arith.addf %90, %120 : vector<8x128xf32>
    %c0_57 = arith.constant 0 : index
    %c92 = arith.constant 92 : index
    %122 = vector.load %arg2[%c0_57, %c92] : memref<16x128xf32, #tpu.memory_space<vmem>>, vector<8x8xf32>
    %cst_58 = arith.constant 0.000000e+00 : f32
    %123 = vector.broadcast %cst_58 : f32 to vector<8x128xf32>
    %124 = arith.maximumf %121, %123 : vector<8x128xf32>
    %cst_59 = arith.constant dense<0.000000e+00> : vector<8x128xf32>
    %125 = tpu.matmul %122, %124, %cst_59 {dimension_numbers = #tpu.dot_dimension_numbers<[1], [0], [0], [1], [0, 0, 1, 1], [], []>} : vector<8x8xf32>, vector<8x128xf32>, vector<8x128xf32> -> vector<8x128xf32>
    %c0_60 = arith.constant 0 : index
    %c115 = arith.constant 115 : index
    %126 = vector.load %arg2[%c0_60, %c115] : memref<16x128xf32, #tpu.memory_space<vmem>>, vector<8x1xf32>
    %127 = vector.broadcast %126 : vector<8x1xf32> to vector<8x128xf32>
    %128 = arith.addf %125, %127 : vector<8x128xf32>
    %cst_61 = arith.constant 0.000000e+00 : f32
    %129 = vector.broadcast %cst_61 : f32 to vector<8x128xf32>
    %130 = arith.maximumf %128, %129 : vector<8x128xf32>
    %c0_62 = arith.constant 0 : index
    %c100 = arith.constant 100 : index
    %131 = vector.load %arg2[%c0_62, %c100] : memref<16x128xf32, #tpu.memory_space<vmem>>, vector<8x8xf32>
    %cst_63 = arith.constant dense<0.000000e+00> : vector<8x128xf32>
    %132 = tpu.matmul %131, %130, %cst_63 {dimension_numbers = #tpu.dot_dimension_numbers<[1], [0], [0], [1], [0, 0, 1, 1], [], []>} : vector<8x8xf32>, vector<8x128xf32>, vector<8x128xf32> -> vector<8x128xf32>
    %c0_64 = arith.constant 0 : index
    %c116 = arith.constant 116 : index
    %133 = vector.load %arg2[%c0_64, %c116] : memref<16x128xf32, #tpu.memory_space<vmem>>, vector<8x1xf32>
    %134 = vector.broadcast %133 : vector<8x1xf32> to vector<8x128xf32>
    %135 = arith.addf %132, %134 : vector<8x128xf32>
    %cst_65 = arith.constant dense<0xFF800000> : vector<128xf32>
    %136 = vector.multi_reduction <maximumf>, %135, %cst_65 [0] : vector<8x128xf32> to vector<128xf32>
    %137 = vector.shape_cast %136 : vector<128xf32> to vector<1x128xf32>
    %138 = vector.broadcast %137 : vector<1x128xf32> to vector<8x128xf32>
    %139 = arith.subf %135, %138 : vector<8x128xf32>
    %140 = math.exp %139 : vector<8x128xf32>
    %cst_66 = arith.constant dense<0.000000e+00> : vector<128xf32>
    %141 = vector.multi_reduction <add>, %140, %cst_66 [0] : vector<8x128xf32> to vector<128xf32>
    %142 = vector.shape_cast %141 : vector<128xf32> to vector<1x128xf32>
    %143 = tpu.reciprocal %142 {approx = true} : vector<1x128xf32> -> vector<1x128xf32>
    %144 = vector.broadcast %143 : vector<1x128xf32> to vector<8x128xf32>
    %145 = arith.mulf %140, %144 : vector<8x128xf32>
    %146 = tpu.iota {dimensions = array<i32: 1>} : vector<8x128xi32>
    %c16_i32_67 = arith.constant 16 : i32
    %c0_i32_68 = arith.constant 0 : i32
    %147 = arith.cmpi eq, %c16_i32_67, %c0_i32_68 : i32
    %c1_i32_69 = arith.constant 1 : i32
    %148 = arith.select %147, %c1_i32_69, %c16_i32_67 : i32
    %149 = vector.broadcast %148 : i32 to vector<8x128xi32>
    %150 = arith.remsi %146, %149 : vector<8x128xi32>
    %c0_i32_70 = arith.constant 0 : i32
    %151 = vector.broadcast %c0_i32_70 : i32 to vector<8x128xi32>
    %152 = arith.cmpi ne, %150, %151 : vector<8x128xi32>
    %c0_i32_71 = arith.constant 0 : i32
    %153 = vector.broadcast %c0_i32_71 : i32 to vector<8x128xi32>
    %154 = arith.cmpi slt, %150, %153 : vector<8x128xi32>
    %c0_i32_72 = arith.constant 0 : i32
    %155 = arith.cmpi slt, %148, %c0_i32_72 : i32
    %156 = vector.broadcast %155 : i1 to vector<8x128xi1>
    %157 = vector.broadcast %156 : vector<8x128xi1> to vector<8x128xi1>
    %158 = arith.xori %154, %157 : vector<8x128xi1>
    %159 = arith.andi %158, %152 : vector<8x128xi1>
    %160 = vector.broadcast %148 : i32 to vector<8x128xi32>
    %161 = arith.addi %150, %160 : vector<8x128xi32>
    %162 = arith.select %159, %161, %150 : vector<8x128xi1>, vector<8x128xi32>
    %c0_i32_73 = arith.constant 0 : i32
    %163 = vector.broadcast %c0_i32_73 : i32 to vector<8x128xi32>
    %164 = arith.cmpi eq, %162, %163 : vector<8x128xi32>
    %c1_i32_74 = arith.constant 1 : i32
    %165 = tpu.dynamic_rotate %145 by %c1_i32_74 dim 1 : vector<8x128xf32>, i32 -> vector<8x128xf32>
    %cst_75 = arith.constant 1.000000e+00 : f32
    %166 = vector.broadcast %cst_75 : f32 to vector<8x128xf32>
    %167 = arith.select %164, %166, %165 : vector<8x128xi1>, vector<8x128xf32>
    %c0_76 = arith.constant 0 : index
    %c0_77 = arith.constant 0 : index
    %168 = vector.load %arg3[%c0_76, %c0_77] : memref<8x128xf32, #tpu.memory_space<vmem>>, vector<8x128xf32>
    tpu.vector_store %arg3[%c0_76, %c0_77], %167 {strides = array<i32>} : memref<8x128xf32, #tpu.memory_space<vmem>>, vector<8x128xf32>,
    return
  }
}

</mosaic_0001>

<llo_original>
// kernel: better_wavenet_decoder.1
$region0: #{better_wavenet_decoder.1}
  #allocation0 [shape = 'u32[]', space=smem, size = 0x4, offset = 0x4, fixed_abs, tag = 'smem constant byte address 0x4 - core index']
  #allocation1 [shape = 'u32[144,128]{1,0:T(1,128)}', space=vmem, size = 0x12000, scoped, tag = 'internal scratch']
  #allocation2 [shape = 'f32[20,128]{1,0:T(8,128)}', space=vmem, size = 0x3000, scoped, tag = 'scratch operand']
  %s0 = inlined_call_operand.vmem [shape: s32[1,128], index: 0, kind: input, shape index: {}]
  %s1 = inlined_call_operand.vmem [shape: f32[4,128], index: 1, kind: input, shape index: {}]
  %s2 = inlined_call_operand.vmem [shape: f32[16,128], index: 2, kind: input, shape index: {}]
  %s3 = inlined_call_operand.vmem [shape: f32[8,128], index: 3, kind: output, shape index: {}]
  %s4 = sld [smem:[#allocation0]]
  $region22: #{better_wavenet_decoder.1} parent=0
    _
  %s6 = ssub.s32 1, %s4
  %s7 = scalar_select 0, %s6, %s4
  // Predicated region
  $region2: #{better_wavenet_decoder.1} parent=0 // pred_check
    _
  $region3: #{better_wavenet_decoder.1} parent=0 // pred_check_branch
    %9 = sbr.rel (0) target = $region5
  $region4: #{better_wavenet_decoder.1} parent=0 // pred_region
    _
  $region5: #{better_wavenet_decoder.1} parent=0 // pred_fallthru
    _
  // Predicated region
  $region6: #{better_wavenet_decoder.1} parent=0 // pred_check
    _
  $region7: #{better_wavenet_decoder.1} parent=0 // pred_check_branch
    %11 = sbr.rel (0) target = $region9
  $region8: #{better_wavenet_decoder.1} parent=0 // pred_region
    _
  $region9: #{better_wavenet_decoder.1} parent=0 // pred_fallthru
    _
  // Predicated region
  $region10: #{better_wavenet_decoder.1} parent=0 // pred_check
    _
  $region11: #{better_wavenet_decoder.1} parent=0 // pred_check_branch
    %13 = sbr.rel (0) target = $region13
  $region12: #{better_wavenet_decoder.1} parent=0 // pred_region
    _
  $region13: #{better_wavenet_decoder.1} parent=0 // pred_fallthru
    _
  %v14 = vlaneseq
  %v15 = vshrl.u32 %v14, 7
  %v16 = vld [vmem:[%s0] sm:$0x1]
  %v17 = vlaneseq
  %v18 = vshrl.u32 %v17, 7
  %v19 = vsub.s32 0, %v18
  %v20 = vrot.slane %v16, %v19
  %vm21 = vcmp.eq.s32.totalorder %v15, %v20
  %v22 = vsel %vm21, 1, 0
  %v23 = vcvt.s32.f32 %v22
  %v24 = vld [vmem:[%s2] sm:$0xff]
  %26 = vset.pattern.permute.xlu0 108
  %27 = vperm.xlu0 %26, %v24
  %v28 = vpop.permute.xlu0 %27
  %vm30 = vcmask 64512
  %v31 = vsel %vm30, %v24, 0
  %33 = vmatprep.subr.mxu0 0.0
  %34 = vmatpush1.msra.mxu0 %v23
  %35 = vmatprep.subr.mxu0 0.0
  %36 = vmatpush1.msra.mxu0 0.0
  %37 = vmatprep.subr.mxu0 0.0
  %38 = vmatpush1.msra.mxu0 0.0
  %39 = vmatprep.subr.mxu0 0.0
  %40 = vmatpush1.msra.mxu0 0.0
  %41 = vmatprep.subr.mxu0 0.0
  %42 = vmatpush1.msra.mxu0 0.0
  %43 = vmatprep.subr.mxu0 0.0
  %44 = vmatpush1.msra.mxu0 0.0
  %45 = vmatprep.subr.mxu0 0.0
  %46 = vmatpush1.msra.mxu0 0.0
  %47 = vmatprep.subr.mxu0 0.0
  %48 = vmatpush1.msra.mxu0 0.0
  %49 = vmatprep.subr.mxu0 0.0
  %50 = vmatpush1.msra.mxu0 0.0
  %51 = vmatprep.subr.mxu0 0.0
  %52 = vmatpush1.msra.mxu0 0.0
  %53 = vmatprep.subr.mxu0 0.0
  %54 = vmatpush1.msra.mxu0 0.0
  %55 = vmatprep.subr.mxu0 0.0
  %56 = vmatpush1.msra.mxu0 0.0
  %57 = vmatprep.subr.mxu0 0.0
  %58 = vmatpush1.msra.mxu0 0.0
  %59 = vmatprep.subr.mxu0 0.0
  %60 = vmatpush1.msra.mxu0 0.0
  %61 = vmatprep.subr.mxu0 0.0
  %62 = vmatpush1.msra.mxu0 0.0
  %63 = vmatprep.subr.mxu0 0.0
  %64 = vmatpush1.msra.mxu0 0.0
  %65 = vmatprep.subr.mxu0 0.0
  %66 = vmatpush1.msra.mxu0 0.0
  %67 = vmatprep.subr.mxu0 0.0
  %68 = vmatpush1.msra.mxu0 0.0
  %69 = vmatprep.subr.mxu0 0.0
  %70 = vmatpush1.msra.mxu0 0.0
  %71 = vmatprep.subr.mxu0 0.0
  %72 = vmatpush1.msra.mxu0 0.0
  %73 = vmatprep.subr.mxu0 0.0
  %74 = vmatpush1.msra.mxu0 0.0
  %75 = vmatprep.subr.mxu0 0.0
  %76 = vmatpush1.msra.mxu0 0.0
  %77 = vmatprep.subr.mxu0 0.0
  %78 = vmatpush1.msra.mxu0 0.0
  %79 = vmatprep.subr.mxu0 0.0
  %80 = vmatpush1.msra.mxu0 0.0
  %81 = vmatprep.subr.mxu0 0.0
  %82 = vmatpush1.msra.mxu0 0.0
  %83 = vmatprep.subr.mxu0 0.0
  %84 = vmatpush1.msra.mxu0 0.0
  %85 = vmatprep.subr.mxu0 0.0
  %86 = vmatpush1.msra.mxu0 0.0
  %87 = vmatprep.subr.mxu0 0.0
  %88 = vmatpush1.msra.mxu0 0.0
  %89 = vmatprep.subr.mxu0 0.0
  %90 = vmatpush1.msra.mxu0 0.0
  %91 = vmatprep.subr.mxu0 0.0
  %92 = vmatpush1.msra.mxu0 0.0
  %93 = vmatprep.subr.mxu0 0.0
  %94 = vmatpush1.msra.mxu0 0.0
  %95 = vmatprep.subr.mxu0 0.0
  %96 = vmatpush1.msra.mxu0 0.0
  %97 = vmatprep.mubr.f32.mxu0 0.0
  %98 = vmatmul.mubr.f32.gmra.mrb[0].mxu0 %v31
  %v99 = vpop.f32.mrb[0].mxu0
  %v100 = vadd.f32 %v28, %v99
  %v101 = vpop.f32.mrb[0].mxu0
  %102 = vdwg.mxu0
  %v103 = vld [vmem:[%s1] sm:$0xf]
  %104 = vst [vmem:[#allocation2 + $0x10] sm:$0xf] %v103
  %v105 = vlaneseq
  %v106 = vand.u32 %v105, 127
  %vm107 = vcmp.lt.s32.totalorder %v106, 0
  %v108 = vsub.s32 0, %v106
  %v109 = vsel %vm107, %v108, %v106
  %v110 = vshrl.u32 %v109, 4
  %v111 = vand.u32 %v109, 15
  %v112 = vsub.s32 0, %v111
  %v113 = vsel %vm107, %v112, %v111
  %vm114 = vcmp.ne.s32.totalorder %v113, 0
  %vm115 = vcmp.lt.s32.totalorder %v113, 0
  %vm116 = vmand %vm115, %vm114
  %v117 = vadd.s32 %v113, 16
  %v118 = vsel %vm116, %v117, %v113
  %vm119 = vcmp.ge.s32.totalorder %v118, 1
  %120 = vrot.lane.b32.xlu0 %v100, 1
  %v121 = vpop.permute.xlu0 %120
  %v122 = vsel %vm119, %v121, 0.0
  %123 = vst [vmem:[#allocation2] sm:$0xff] %v100
  %124 = vst [vmem:[#allocation2 + $0x8] sm:$0xff] %v122
  %v125 = vld [vmem:[%s2] sm:$0xff]
  %v126 = vld [vmem:[%s2 + $0x8] sm:$0xff]
  %v127 = vld [vmem:[#allocation2] sm:$0xff]
  %v128 = vld [vmem:[#allocation2 + $0x8] sm:$0xff]
  %v129 = vld [vmem:[#allocation2 + $0x10] sm:$0xf]
  %131 = vset.pattern.permute.xlu0 109
  %132 = vperm.xlu0 %131, %v125
  %v133 = vpop.permute.xlu0 %132
  %136 = vset.pattern.permute.xlu0 109
  %137 = vperm.xlu0 %136, %v126
  %v138 = vpop.permute.xlu0 %137
  %140 = vrot.lane.b32.xlu0 %v125, 120
  %v141 = vpop.permute.xlu0 %140
  %142 = vrot.lane.b32.xlu0 %v126, 120
  %v143 = vpop.permute.xlu0 %142
  %vm144 = vcmask 162816
  %v145 = vsel %vm144, %v141, 0
  %v147 = vsel %vm144, %v143, 0
  %vm149 = vcmask 1043456
  %v151 = vsel %vm149, %v129, 0
  %153 = vmatprep.subr.mxu0 0.0
  %154 = vmatpush1.msra.mxu0 %v127
  %155 = vmatprep.subr.mxu0 0.0
  %156 = vmatpush1.msra.mxu0 %v128
  %157 = vmatprep.subr.mxu0 0.0
  %158 = vmatpush1.msra.mxu0 %v151
  %159 = vmatprep.subr.mxu0 0.0
  %160 = vmatpush1.msra.mxu0 0.0
  %161 = vmatprep.subr.mxu0 0.0
  %162 = vmatpush1.msra.mxu0 0.0
  %163 = vmatprep.subr.mxu0 0.0
  %164 = vmatpush1.msra.mxu0 0.0
  %165 = vmatprep.subr.mxu0 0.0
  %166 = vmatpush1.msra.mxu0 0.0
  %167 = vmatprep.subr.mxu0 0.0
  %168 = vmatpush1.msra.mxu0 0.0
  %169 = vmatprep.subr.mxu0 0.0
  %170 = vmatpush1.msra.mxu0 0.0
  %171 = vmatprep.subr.mxu0 0.0
  %172 = vmatpush1.msra.mxu0 0.0
  %173 = vmatprep.subr.mxu0 0.0
  %174 = vmatpush1.msra.mxu0 0.0
  %175 = vmatprep.subr.mxu0 0.0
  %176 = vmatpush1.msra.mxu0 0.0
  %177 = vmatprep.subr.mxu0 0.0
  %178 = vmatpush1.msra.mxu0 0.0
  %179 = vmatprep.subr.mxu0 0.0
  %180 = vmatpush1.msra.mxu0 0.0
  %181 = vmatprep.subr.mxu0 0.0
  %182 = vmatpush1.msra.mxu0 0.0
  %183 = vmatprep.subr.mxu0 0.0
  %184 = vmatpush1.msra.mxu0 0.0
  %185 = vmatprep.subr.mxu0 0.0
  %186 = vmatpush1.msra.mxu0 0.0
  %187 = vmatprep.subr.mxu0 0.0
  %188 = vmatpush1.msra.mxu0 0.0
  %189 = vmatprep.subr.mxu0 0.0
  %190 = vmatpush1.msra.mxu0 0.0
  %191 = vmatprep.subr.mxu0 0.0
  %192 = vmatpush1.msra.mxu0 0.0
  %193 = vmatprep.subr.mxu0 0.0
  %194 = vmatpush1.msra.mxu0 0.0
  %195 = vmatprep.subr.mxu0 0.0
  %196 = vmatpush1.msra.mxu0 0.0
  %197 = vmatprep.subr.mxu0 0.0
  %198 = vmatpush1.msra.mxu0 0.0
  %199 = vmatprep.subr.mxu0 0.0
  %200 = vmatpush1.msra.mxu0 0.0
  %201 = vmatprep.subr.mxu0 0.0
  %202 = vmatpush1.msra.mxu0 0.0
  %203 = vmatprep.subr.mxu0 0.0
  %204 = vmatpush1.msra.mxu0 0.0
  %205 = vmatprep.subr.mxu0 0.0
  %206 = vmatpush1.msra.mxu0 0.0
  %207 = vmatprep.subr.mxu0 0.0
  %208 = vmatpush1.msra.mxu0 0.0
  %209 = vmatprep.subr.mxu0 0.0
  %210 = vmatpush1.msra.mxu0 0.0
  %211 = vmatprep.subr.mxu0 0.0
  %212 = vmatpush1.msra.mxu0 0.0
  %213 = vmatprep.subr.mxu0 0.0
  %214 = vmatpush1.msra.mxu0 0.0
  %215 = vmatprep.subr.mxu0 0.0
  %216 = vmatpush1.msra.mxu0 0.0
  %217 = vmatprep.mubr.f32.mxu0 0.0
  %218 = vmatmul.mubr.f32.gmra.mrb[0].mxu0 %v145
  %v219 = vpop.f32.mrb[0].mxu0
  %v220 = vadd.f32 %v133, %v219
  %v221 = vpop.f32.mrb[0].mxu0
  %222 = vmatprep.mubr.f32.mxu0 0.0
  %223 = vmatmul.mubr.f32.gmra.mrb[0].mxu0 %v147
  %v224 = vpop.f32.mrb[0].mxu0
  %v225 = vadd.f32 %v138, %v224
  %v226 = vpop.f32.mrb[0].mxu0
  %227 = vdwg.mxu0
  %v228 = vtanh.pop %v220
  %v229 = vxor.u32 %v225, 2147483648
  %v230 = vmul.f32 %v229, 1.442695
  %v231 = vpow.pop %v230
  %v232 = vadd.f32 %v231, 1.0
  %v233 = vrcp.pop %v232
  %v234 = vmul.f32 1.0, %v233
  %v235 = vmul.f32 %v228, %v234
  %236 = vset.pattern.permute.xlu0 112
  %237 = vperm.xlu0 %236, %v125
  %v238 = vpop.permute.xlu0 %237
  %240 = vset.pattern.permute.xlu0 112
  %241 = vperm.xlu0 %240, %v126
  %v242 = vpop.permute.xlu0 %241
  %244 = vrot.lane.b32.xlu0 %v125, 60
  %v245 = vpop.permute.xlu0 %244
  %246 = vrot.lane.b32.xlu0 %v126, 60
  %v247 = vpop.permute.xlu0 %246
  %v248 = vsel %vm30, %v245, 0
  %v250 = vsel %vm30, %v247, 0
  %252 = vmatprep.subr.mxu0 0.0
  %253 = vmatpush1.msra.mxu0 %v235
  %254 = vmatprep.subr.mxu0 0.0
  %255 = vmatpush1.msra.mxu0 0.0
  %256 = vmatprep.subr.mxu0 0.0
  %257 = vmatpush1.msra.mxu0 0.0
  %258 = vmatprep.subr.mxu0 0.0
  %259 = vmatpush1.msra.mxu0 0.0
  %260 = vmatprep.subr.mxu0 0.0
  %261 = vmatpush1.msra.mxu0 0.0
  %262 = vmatprep.subr.mxu0 0.0
  %263 = vmatpush1.msra.mxu0 0.0
  %264 = vmatprep.subr.mxu0 0.0
  %265 = vmatpush1.msra.mxu0 0.0
  %266 = vmatprep.subr.mxu0 0.0
  %267 = vmatpush1.msra.mxu0 0.0
  %268 = vmatprep.subr.mxu0 0.0
  %269 = vmatpush1.msra.mxu0 0.0
  %270 = vmatprep.subr.mxu0 0.0
  %271 = vmatpush1.msra.mxu0 0.0
  %272 = vmatprep.subr.mxu0 0.0
  %273 = vmatpush1.msra.mxu0 0.0
  %274 = vmatprep.subr.mxu0 0.0
  %275 = vmatpush1.msra.mxu0 0.0
  %276 = vmatprep.subr.mxu0 0.0
  %277 = vmatpush1.msra.mxu0 0.0
  %278 = vmatprep.subr.mxu0 0.0
  %279 = vmatpush1.msra.mxu0 0.0
  %280 = vmatprep.subr.mxu0 0.0
  %281 = vmatpush1.msra.mxu0 0.0
  %282 = vmatprep.subr.mxu0 0.0
  %283 = vmatpush1.msra.mxu0 0.0
  %284 = vmatprep.subr.mxu0 0.0
  %285 = vmatpush1.msra.mxu0 0.0
  %286 = vmatprep.subr.mxu0 0.0
  %287 = vmatpush1.msra.mxu0 0.0
  %288 = vmatprep.subr.mxu0 0.0
  %289 = vmatpush1.msra.mxu0 0.0
  %290 = vmatprep.subr.mxu0 0.0
  %291 = vmatpush1.msra.mxu0 0.0
  %292 = vmatprep.subr.mxu0 0.0
  %293 = vmatpush1.msra.mxu0 0.0
  %294 = vmatprep.subr.mxu0 0.0
  %295 = vmatpush1.msra.mxu0 0.0
  %296 = vmatprep.subr.mxu0 0.0
  %297 = vmatpush1.msra.mxu0 0.0
  %298 = vmatprep.subr.mxu0 0.0
  %299 = vmatpush1.msra.mxu0 0.0
  %300 = vmatprep.subr.mxu0 0.0
  %301 = vmatpush1.msra.mxu0 0.0
  %302 = vmatprep.subr.mxu0 0.0
  %303 = vmatpush1.msra.mxu0 0.0
  %304 = vmatprep.subr.mxu0 0.0
  %305 = vmatpush1.msra.mxu0 0.0
  %306 = vmatprep.subr.mxu0 0.0
  %307 = vmatpush1.msra.mxu0 0.0
  %308 = vmatprep.subr.mxu0 0.0
  %309 = vmatpush1.msra.mxu0 0.0
  %310 = vmatprep.subr.mxu0 0.0
  %311 = vmatpush1.msra.mxu0 0.0
  %312 = vmatprep.subr.mxu0 0.0
  %313 = vmatpush1.msra.mxu0 0.0
  %314 = vmatprep.subr.mxu0 0.0
  %315 = vmatpush1.msra.mxu0 0.0
  %316 = vmatprep.mubr.f32.mxu0 0.0
  %317 = vmatmul.mubr.f32.gmra.mrb[0].mxu0 %v248
  %v318 = vpop.f32.mrb[0].mxu0
  %v319 = vadd.f32 %v238, %v318
  %v320 = vpop.f32.mrb[0].mxu0
  %321 = vmatprep.mubr.f32.mxu0 0.0
  %322 = vmatmul.mubr.f32.gmra.mrb[0].mxu0 %v250
  %v323 = vpop.f32.mrb[0].mxu0
  %v324 = vadd.f32 %v242, %v323
  %v325 = vpop.f32.mrb[0].mxu0
  %326 = vdwg.mxu0
  %v327 = vadd.f32 %v319, 0.0
  %v328 = vadd.f32 %v100, %v324
  %vm329 = vcmp.ge.s32.totalorder %v118, 2
  %330 = vrot.lane.b32.xlu0 %v328, 2
  %v331 = vpop.permute.xlu0 %330
  %v332 = vsel %vm329, %v331, 0.0
  %333 = vst [vmem:[#allocation2] sm:$0xff] %v328
  %334 = vst [vmem:[#allocation2 + $0x8] sm:$0xff] %v332
  %v335 = vld [vmem:[%s2] sm:$0xff]
  %v336 = vld [vmem:[%s2 + $0x8] sm:$0xff]
  %v337 = vld [vmem:[#allocation2] sm:$0xff]
  %v338 = vld [vmem:[#allocation2 + $0x8] sm:$0xff]
  %v339 = vld [vmem:[#allocation2 + $0x10] sm:$0xf]
  %341 = vset.pattern.permute.xlu0 110
  %342 = vperm.xlu0 %341, %v335
  %v343 = vpop.permute.xlu0 %342
  %346 = vset.pattern.permute.xlu0 110
  %347 = vperm.xlu0 %346, %v336
  %v348 = vpop.permute.xlu0 %347
  %350 = vrot.lane.b32.xlu0 %v335, 100
  %v351 = vpop.permute.xlu0 %350
  %352 = vrot.lane.b32.xlu0 %v336, 100
  %v353 = vpop.permute.xlu0 %352
  %v354 = vsel %vm144, %v351, 0
  %v356 = vsel %vm144, %v353, 0
  %v359 = vsel %vm149, %v339, 0
  %361 = vmatprep.subr.mxu0 0.0
  %362 = vmatpush1.msra.mxu0 %v337
  %363 = vmatprep.subr.mxu0 0.0
  %364 = vmatpush1.msra.mxu0 %v338
  %365 = vmatprep.subr.mxu0 0.0
  %366 = vmatpush1.msra.mxu0 %v359
  %367 = vmatprep.subr.mxu0 0.0
  %368 = vmatpush1.msra.mxu0 0.0
  %369 = vmatprep.subr.mxu0 0.0
  %370 = vmatpush1.msra.mxu0 0.0
  %371 = vmatprep.subr.mxu0 0.0
  %372 = vmatpush1.msra.mxu0 0.0
  %373 = vmatprep.subr.mxu0 0.0
  %374 = vmatpush1.msra.mxu0 0.0
  %375 = vmatprep.subr.mxu0 0.0
  %376 = vmatpush1.msra.mxu0 0.0
  %377 = vmatprep.subr.mxu0 0.0
  %378 = vmatpush1.msra.mxu0 0.0
  %379 = vmatprep.subr.mxu0 0.0
  %380 = vmatpush1.msra.mxu0 0.0
  %381 = vmatprep.subr.mxu0 0.0
  %382 = vmatpush1.msra.mxu0 0.0
  %383 = vmatprep.subr.mxu0 0.0
  %384 = vmatpush1.msra.mxu0 0.0
  %385 = vmatprep.subr.mxu0 0.0
  %386 = vmatpush1.msra.mxu0 0.0
  %387 = vmatprep.subr.mxu0 0.0
  %388 = vmatpush1.msra.mxu0 0.0
  %389 = vmatprep.subr.mxu0 0.0
  %390 = vmatpush1.msra.mxu0 0.0
  %391 = vmatprep.subr.mxu0 0.0
  %392 = vmatpush1.msra.mxu0 0.0
  %393 = vmatprep.subr.mxu0 0.0
  %394 = vmatpush1.msra.mxu0 0.0
  %395 = vmatprep.subr.mxu0 0.0
  %396 = vmatpush1.msra.mxu0 0.0
  %397 = vmatprep.subr.mxu0 0.0
  %398 = vmatpush1.msra.mxu0 0.0
  %399 = vmatprep.subr.mxu0 0.0
  %400 = vmatpush1.msra.mxu0 0.0
  %401 = vmatprep.subr.mxu0 0.0
  %402 = vmatpush1.msra.mxu0 0.0
  %403 = vmatprep.subr.mxu0 0.0
  %404 = vmatpush1.msra.mxu0 0.0
  %405 = vmatprep.subr.mxu0 0.0
  %406 = vmatpush1.msra.mxu0 0.0
  %407 = vmatprep.subr.mxu0 0.0
  %408 = vmatpush1.msra.mxu0 0.0
  %409 = vmatprep.subr.mxu0 0.0
  %410 = vmatpush1.msra.mxu0 0.0
  %411 = vmatprep.subr.mxu0 0.0
  %412 = vmatpush1.msra.mxu0 0.0
  %413 = vmatprep.subr.mxu0 0.0
  %414 = vmatpush1.msra.mxu0 0.0
  %415 = vmatprep.subr.mxu0 0.0
  %416 = vmatpush1.msra.mxu0 0.0
  %417 = vmatprep.subr.mxu0 0.0
  %418 = vmatpush1.msra.mxu0 0.0
  %419 = vmatprep.subr.mxu0 0.0
  %420 = vmatpush1.msra.mxu0 0.0
  %421 = vmatprep.subr.mxu0 0.0
  %422 = vmatpush1.msra.mxu0 0.0
  %423 = vmatprep.subr.mxu0 0.0
  %424 = vmatpush1.msra.mxu0 0.0
  %425 = vmatprep.mubr.f32.mxu0 0.0
  %426 = vmatmul.mubr.f32.gmra.mrb[0].mxu0 %v354
  %v427 = vpop.f32.mrb[0].mxu0
  %v428 = vadd.f32 %v343, %v427
  %v429 = vpop.f32.mrb[0].mxu0
  %430 = vmatprep.mubr.f32.mxu0 0.0
  %431 = vmatmul.mubr.f32.gmra.mrb[0].mxu0 %v356
  %v432 = vpop.f32.mrb[0].mxu0
  %v433 = vadd.f32 %v348, %v432
  %v434 = vpop.f32.mrb[0].mxu0
  %435 = vdwg.mxu0
  %v436 = vtanh.pop %v428
  %v437 = vxor.u32 %v433, 2147483648
  %v438 = vmul.f32 %v437, 1.442695
  %v439 = vpow.pop %v438
  %v440 = vadd.f32 %v439, 1.0
  %v441 = vrcp.pop %v440
  %v442 = vmul.f32 1.0, %v441
  %v443 = vmul.f32 %v436, %v442
  %444 = vset.pattern.permute.xlu0 113
  %445 = vperm.xlu0 %444, %v335
  %v446 = vpop.permute.xlu0 %445
  %448 = vset.pattern.permute.xlu0 113
  %449 = vperm.xlu0 %448, %v336
  %v450 = vpop.permute.xlu0 %449
  %452 = vrot.lane.b32.xlu0 %v335, 52
  %v453 = vpop.permute.xlu0 %452
  %454 = vrot.lane.b32.xlu0 %v336, 52
  %v455 = vpop.permute.xlu0 %454
  %v456 = vsel %vm30, %v453, 0
  %v458 = vsel %vm30, %v455, 0
  %460 = vmatprep.subr.mxu0 0.0
  %461 = vmatpush1.msra.mxu0 %v443
  %462 = vmatprep.subr.mxu0 0.0
  %463 = vmatpush1.msra.mxu0 0.0
  %464 = vmatprep.subr.mxu0 0.0
  %465 = vmatpush1.msra.mxu0 0.0
  %466 = vmatprep.subr.mxu0 0.0
  %467 = vmatpush1.msra.mxu0 0.0
  %468 = vmatprep.subr.mxu0 0.0
  %469 = vmatpush1.msra.mxu0 0.0
  %470 = vmatprep.subr.mxu0 0.0
  %471 = vmatpush1.msra.mxu0 0.0
  %472 = vmatprep.subr.mxu0 0.0
  %473 = vmatpush1.msra.mxu0 0.0
  %474 = vmatprep.subr.mxu0 0.0
  %475 = vmatpush1.msra.mxu0 0.0
  %476 = vmatprep.subr.mxu0 0.0
  %477 = vmatpush1.msra.mxu0 0.0
  %478 = vmatprep.subr.mxu0 0.0
  %479 = vmatpush1.msra.mxu0 0.0
  %480 = vmatprep.subr.mxu0 0.0
  %481 = vmatpush1.msra.mxu0 0.0
  %482 = vmatprep.subr.mxu0 0.0
  %483 = vmatpush1.msra.mxu0 0.0
  %484 = vmatprep.subr.mxu0 0.0
  %485 = vmatpush1.msra.mxu0 0.0
  %486 = vmatprep.subr.mxu0 0.0
  %487 = vmatpush1.msra.mxu0 0.0
  %488 = vmatprep.subr.mxu0 0.0
  %489 = vmatpush1.msra.mxu0 0.0
  %490 = vmatprep.subr.mxu0 0.0
  %491 = vmatpush1.msra.mxu0 0.0
  %492 = vmatprep.subr.mxu0 0.0
  %493 = vmatpush1.msra.mxu0 0.0
  %494 = vmatprep.subr.mxu0 0.0
  %495 = vmatpush1.msra.mxu0 0.0
  %496 = vmatprep.subr.mxu0 0.0
  %497 = vmatpush1.msra.mxu0 0.0
  %498 = vmatprep.subr.mxu0 0.0
  %499 = vmatpush1.msra.mxu0 0.0
  %500 = vmatprep.subr.mxu0 0.0
  %501 = vmatpush1.msra.mxu0 0.0
  %502 = vmatprep.subr.mxu0 0.0
  %503 = vmatpush1.msra.mxu0 0.0
  %504 = vmatprep.subr.mxu0 0.0
  %505 = vmatpush1.msra.mxu0 0.0
  %506 = vmatprep.subr.mxu0 0.0
  %507 = vmatpush1.msra.mxu0 0.0
  %508 = vmatprep.subr.mxu0 0.0
  %509 = vmatpush1.msra.mxu0 0.0
  %510 = vmatprep.subr.mxu0 0.0
  %511 = vmatpush1.msra.mxu0 0.0
  %512 = vmatprep.subr.mxu0 0.0
  %513 = vmatpush1.msra.mxu0 0.0
  %514 = vmatprep.subr.mxu0 0.0
  %515 = vmatpush1.msra.mxu0 0.0
  %516 = vmatprep.subr.mxu0 0.0
  %517 = vmatpush1.msra.mxu0 0.0
  %518 = vmatprep.subr.mxu0 0.0
  %519 = vmatpush1.msra.mxu0 0.0
  %520 = vmatprep.subr.mxu0 0.0
  %521 = vmatpush1.msra.mxu0 0.0
  %522 = vmatprep.subr.mxu0 0.0
  %523 = vmatpush1.msra.mxu0 0.0
  %524 = vmatprep.mubr.f32.mxu0 0.0
  %525 = vmatmul.mubr.f32.gmra.mrb[0].mxu0 %v456
  %v526 = vpop.f32.mrb[0].mxu0
  %v527 = vadd.f32 %v446, %v526
  %v528 = vpop.f32.mrb[0].mxu0
  %529 = vmatprep.mubr.f32.mxu0 0.0
  %530 = vmatmul.mubr.f32.gmra.mrb[0].mxu0 %v458
  %v531 = vpop.f32.mrb[0].mxu0
  %v532 = vadd.f32 %v450, %v531
  %v533 = vpop.f32.mrb[0].mxu0
  %534 = vdwg.mxu0
  %v535 = vadd.f32 %v327, %v527
  %v536 = vadd.f32 %v328, %v532
  %vm537 = vcmp.ge.s32.totalorder %v118, 4
  %538 = vrot.lane.b32.xlu0 %v536, 4
  %v539 = vpop.permute.xlu0 %538
  %v540 = vsel %vm537, %v539, 0.0
  %541 = vst [vmem:[#allocation2] sm:$0xff] %v536
  %542 = vst [vmem:[#allocation2 + $0x8] sm:$0xff] %v540
  %v543 = vld [vmem:[%s2] sm:$0xff]
  %v544 = vld [vmem:[%s2 + $0x8] sm:$0xff]
  %v545 = vld [vmem:[#allocation2] sm:$0xff]
  %v546 = vld [vmem:[#allocation2 + $0x8] sm:$0xff]
  %v547 = vld [vmem:[#allocation2 + $0x10] sm:$0xf]
  %549 = vset.pattern.permute.xlu0 111
  %550 = vperm.xlu0 %549, %v543
  %v551 = vpop.permute.xlu0 %550
  %554 = vset.pattern.permute.xlu0 111
  %555 = vperm.xlu0 %554, %v544
  %v556 = vpop.permute.xlu0 %555
  %558 = vrot.lane.b32.xlu0 %v543, 80
  %v559 = vpop.permute.xlu0 %558
  %560 = vrot.lane.b32.xlu0 %v544, 80
  %v561 = vpop.permute.xlu0 %560
  %v562 = vsel %vm144, %v559, 0
  %v564 = vsel %vm144, %v561, 0
  %v567 = vsel %vm149, %v547, 0
  %569 = vmatprep.subr.mxu0 0.0
  %570 = vmatpush1.msra.mxu0 %v545
  %571 = vmatprep.subr.mxu0 0.0
  %572 = vmatpush1.msra.mxu0 %v546
  %573 = vmatprep.subr.mxu0 0.0
  %574 = vmatpush1.msra.mxu0 %v567
  %575 = vmatprep.subr.mxu0 0.0
  %576 = vmatpush1.msra.mxu0 0.0
  %577 = vmatprep.subr.mxu0 0.0
  %578 = vmatpush1.msra.mxu0 0.0
  %579 = vmatprep.subr.mxu0 0.0
  %580 = vmatpush1.msra.mxu0 0.0
  %581 = vmatprep.subr.mxu0 0.0
  %582 = vmatpush1.msra.mxu0 0.0
  %583 = vmatprep.subr.mxu0 0.0
  %584 = vmatpush1.msra.mxu0 0.0
  %585 = vmatprep.subr.mxu0 0.0
  %586 = vmatpush1.msra.mxu0 0.0
  %587 = vmatprep.subr.mxu0 0.0
  %588 = vmatpush1.msra.mxu0 0.0
  %589 = vmatprep.subr.mxu0 0.0
  %590 = vmatpush1.msra.mxu0 0.0
  %591 = vmatprep.subr.mxu0 0.0
  %592 = vmatpush1.msra.mxu0 0.0
  %593 = vmatprep.subr.mxu0 0.0
  %594 = vmatpush1.msra.mxu0 0.0
  %595 = vmatprep.subr.mxu0 0.0
  %596 = vmatpush1.msra.mxu0 0.0
  %597 = vmatprep.subr.mxu0 0.0
  %598 = vmatpush1.msra.mxu0 0.0
  %599 = vmatprep.subr.mxu0 0.0
  %600 = vmatpush1.msra.mxu0 0.0
  %601 = vmatprep.subr.mxu0 0.0
  %602 = vmatpush1.msra.mxu0 0.0
  %603 = vmatprep.subr.mxu0 0.0
  %604 = vmatpush1.msra.mxu0 0.0
  %605 = vmatprep.subr.mxu0 0.0
  %606 = vmatpush1.msra.mxu0 0.0
  %607 = vmatprep.subr.mxu0 0.0
  %608 = vmatpush1.msra.mxu0 0.0
  %609 = vmatprep.subr.mxu0 0.0
  %610 = vmatpush1.msra.mxu0 0.0
  %611 = vmatprep.subr.mxu0 0.0
  %612 = vmatpush1.msra.mxu0 0.0
  %613 = vmatprep.subr.mxu0 0.0
  %614 = vmatpush1.msra.mxu0 0.0
  %615 = vmatprep.subr.mxu0 0.0
  %616 = vmatpush1.msra.mxu0 0.0
  %617 = vmatprep.subr.mxu0 0.0
  %618 = vmatpush1.msra.mxu0 0.0
  %619 = vmatprep.subr.mxu0 0.0
  %620 = vmatpush1.msra.mxu0 0.0
  %621 = vmatprep.subr.mxu0 0.0
  %622 = vmatpush1.msra.mxu0 0.0
  %623 = vmatprep.subr.mxu0 0.0
  %624 = vmatpush1.msra.mxu0 0.0
  %625 = vmatprep.subr.mxu0 0.0
  %626 = vmatpush1.msra.mxu0 0.0
  %627 = vmatprep.subr.mxu0 0.0
  %628 = vmatpush1.msra.mxu0 0.0
  %629 = vmatprep.subr.mxu0 0.0
  %630 = vmatpush1.msra.mxu0 0.0
  %631 = vmatprep.subr.mxu0 0.0
  %632 = vmatpush1.msra.mxu0 0.0
  %633 = vmatprep.mubr.f32.mxu0 0.0
  %634 = vmatmul.mubr.f32.gmra.mrb[0].mxu0 %v562
  %v635 = vpop.f32.mrb[0].mxu0
  %v636 = vadd.f32 %v551, %v635
  %v637 = vpop.f32.mrb[0].mxu0
  %638 = vmatprep.mubr.f32.mxu0 0.0
  %639 = vmatmul.mubr.f32.gmra.mrb[0].mxu0 %v564
  %v640 = vpop.f32.mrb[0].mxu0
  %v641 = vadd.f32 %v556, %v640
  %v642 = vpop.f32.mrb[0].mxu0
  %643 = vdwg.mxu0
  %v644 = vtanh.pop %v636
  %v645 = vxor.u32 %v641, 2147483648
  %v646 = vmul.f32 %v645, 1.442695
  %v647 = vpow.pop %v646
  %v648 = vadd.f32 %v647, 1.0
  %v649 = vrcp.pop %v648
  %v650 = vmul.f32 1.0, %v649
  %v651 = vmul.f32 %v644, %v650
  %652 = vset.pattern.permute.xlu0 114
  %653 = vperm.xlu0 %652, %v543
  %v654 = vpop.permute.xlu0 %653
  %656 = vset.pattern.permute.xlu0 114
  %657 = vperm.xlu0 %656, %v544
  %v658 = vpop.permute.xlu0 %657
  %659 = vrot.lane.b32.xlu0 %v543, 44
  %v660 = vpop.permute.xlu0 %659
  %661 = vrot.lane.b32.xlu0 %v544, 44
  %v662 = vpop.permute.xlu0 %661
  %v663 = vsel %vm30, %v660, 0
  %v665 = vsel %vm30, %v662, 0
  %667 = vmatprep.subr.mxu0 0.0
  %668 = vmatpush1.msra.mxu0 %v651
  %669 = vmatprep.subr.mxu0 0.0
  %670 = vmatpush1.msra.mxu0 0.0
  %671 = vmatprep.subr.mxu0 0.0
  %672 = vmatpush1.msra.mxu0 0.0
  %673 = vmatprep.subr.mxu0 0.0
  %674 = vmatpush1.msra.mxu0 0.0
  %675 = vmatprep.subr.mxu0 0.0
  %676 = vmatpush1.msra.mxu0 0.0
  %677 = vmatprep.subr.mxu0 0.0
  %678 = vmatpush1.msra.mxu0 0.0
  %679 = vmatprep.subr.mxu0 0.0
  %680 = vmatpush1.msra.mxu0 0.0
  %681 = vmatprep.subr.mxu0 0.0
  %682 = vmatpush1.msra.mxu0 0.0
  %683 = vmatprep.subr.mxu0 0.0
  %684 = vmatpush1.msra.mxu0 0.0
  %685 = vmatprep.subr.mxu0 0.0
  %686 = vmatpush1.msra.mxu0 0.0
  %687 = vmatprep.subr.mxu0 0.0
  %688 = vmatpush1.msra.mxu0 0.0
  %689 = vmatprep.subr.mxu0 0.0
  %690 = vmatpush1.msra.mxu0 0.0
  %691 = vmatprep.subr.mxu0 0.0
  %692 = vmatpush1.msra.mxu0 0.0
  %693 = vmatprep.subr.mxu0 0.0
  %694 = vmatpush1.msra.mxu0 0.0
  %695 = vmatprep.subr.mxu0 0.0
  %696 = vmatpush1.msra.mxu0 0.0
  %697 = vmatprep.subr.mxu0 0.0
  %698 = vmatpush1.msra.mxu0 0.0
  %699 = vmatprep.subr.mxu0 0.0
  %700 = vmatpush1.msra.mxu0 0.0
  %701 = vmatprep.subr.mxu0 0.0
  %702 = vmatpush1.msra.mxu0 0.0
  %703 = vmatprep.subr.mxu0 0.0
  %704 = vmatpush1.msra.mxu0 0.0
  %705 = vmatprep.subr.mxu0 0.0
  %706 = vmatpush1.msra.mxu0 0.0
  %707 = vmatprep.subr.mxu0 0.0
  %708 = vmatpush1.msra.mxu0 0.0
  %709 = vmatprep.subr.mxu0 0.0
  %710 = vmatpush1.msra.mxu0 0.0
  %711 = vmatprep.subr.mxu0 0.0
  %712 = vmatpush1.msra.mxu0 0.0
  %713 = vmatprep.subr.mxu0 0.0
  %714 = vmatpush1.msra.mxu0 0.0
  %715 = vmatprep.subr.mxu0 0.0
  %716 = vmatpush1.msra.mxu0 0.0
  %717 = vmatprep.subr.mxu0 0.0
  %718 = vmatpush1.msra.mxu0 0.0
  %719 = vmatprep.subr.mxu0 0.0
  %720 = vmatpush1.msra.mxu0 0.0
  %721 = vmatprep.subr.mxu0 0.0
  %722 = vmatpush1.msra.mxu0 0.0
  %723 = vmatprep.subr.mxu0 0.0
  %724 = vmatpush1.msra.mxu0 0.0
  %725 = vmatprep.subr.mxu0 0.0
  %726 = vmatpush1.msra.mxu0 0.0
  %727 = vmatprep.subr.mxu0 0.0
  %728 = vmatpush1.msra.mxu0 0.0
  %729 = vmatprep.subr.mxu0 0.0
  %730 = vmatpush1.msra.mxu0 0.0
  %731 = vmatprep.mubr.f32.mxu0 0.0
  %732 = vmatmul.mubr.f32.gmra.mrb[0].mxu0 %v663
  %v733 = vpop.f32.mrb[0].mxu0
  %v734 = vadd.f32 %v654, %v733
  %v735 = vpop.f32.mrb[0].mxu0
  %736 = vmatprep.mubr.f32.mxu0 0.0
  %737 = vmatmul.mubr.f32.gmra.mrb[0].mxu0 %v665
  %v738 = vpop.f32.mrb[0].mxu0
  %v739 = vpop.f32.mrb[0].mxu0
  %740 = vdwg.mxu0
  %v741 = vadd.f32 %v535, %v734
  %v742 = vld [vmem:[%s2] sm:$0xff]
  %v743 = vmax.f32 %v741, 0.0
  %745 = vset.pattern.permute.xlu0 115
  %746 = vperm.xlu0 %745, %v742
  %v747 = vpop.permute.xlu0 %746
  %749 = vrot.lane.b32.xlu0 %v742, 36
  %v750 = vpop.permute.xlu0 %749
  %v751 = vsel %vm30, %v750, 0
  %753 = vmatprep.subr.mxu0 0.0
  %754 = vmatpush1.msra.mxu0 %v743
  %755 = vmatprep.subr.mxu0 0.0
  %756 = vmatpush1.msra.mxu0 0.0
  %757 = vmatprep.subr.mxu0 0.0
  %758 = vmatpush1.msra.mxu0 0.0
  %759 = vmatprep.subr.mxu0 0.0
  %760 = vmatpush1.msra.mxu0 0.0
  %761 = vmatprep.subr.mxu0 0.0
  %762 = vmatpush1.msra.mxu0 0.0
  %763 = vmatprep.subr.mxu0 0.0
  %764 = vmatpush1.msra.mxu0 0.0
  %765 = vmatprep.subr.mxu0 0.0
  %766 = vmatpush1.msra.mxu0 0.0
  %767 = vmatprep.subr.mxu0 0.0
  %768 = vmatpush1.msra.mxu0 0.0
  %769 = vmatprep.subr.mxu0 0.0
  %770 = vmatpush1.msra.mxu0 0.0
  %771 = vmatprep.subr.mxu0 0.0
  %772 = vmatpush1.msra.mxu0 0.0
  %773 = vmatprep.subr.mxu0 0.0
  %774 = vmatpush1.msra.mxu0 0.0
  %775 = vmatprep.subr.mxu0 0.0
  %776 = vmatpush1.msra.mxu0 0.0
  %777 = vmatprep.subr.mxu0 0.0
  %778 = vmatpush1.msra.mxu0 0.0
  %779 = vmatprep.subr.mxu0 0.0
  %780 = vmatpush1.msra.mxu0 0.0
  %781 = vmatprep.subr.mxu0 0.0
  %782 = vmatpush1.msra.mxu0 0.0
  %783 = vmatprep.subr.mxu0 0.0
  %784 = vmatpush1.msra.mxu0 0.0
  %785 = vmatprep.subr.mxu0 0.0
  %786 = vmatpush1.msra.mxu0 0.0
  %787 = vmatprep.subr.mxu0 0.0
  %788 = vmatpush1.msra.mxu0 0.0
  %789 = vmatprep.subr.mxu0 0.0
  %790 = vmatpush1.msra.mxu0 0.0
  %791 = vmatprep.subr.mxu0 0.0
  %792 = vmatpush1.msra.mxu0 0.0
  %793 = vmatprep.subr.mxu0 0.0
  %794 = vmatpush1.msra.mxu0 0.0
  %795 = vmatprep.subr.mxu0 0.0
  %796 = vmatpush1.msra.mxu0 0.0
  %797 = vmatprep.subr.mxu0 0.0
  %798 = vmatpush1.msra.mxu0 0.0
  %799 = vmatprep.subr.mxu0 0.0
  %800 = vmatpush1.msra.mxu0 0.0
  %801 = vmatprep.subr.mxu0 0.0
  %802 = vmatpush1.msra.mxu0 0.0
  %803 = vmatprep.subr.mxu0 0.0
  %804 = vmatpush1.msra.mxu0 0.0
  %805 = vmatprep.subr.mxu0 0.0
  %806 = vmatpush1.msra.mxu0 0.0
  %807 = vmatprep.subr.mxu0 0.0
  %808 = vmatpush1.msra.mxu0 0.0
  %809 = vmatprep.subr.mxu0 0.0
  %810 = vmatpush1.msra.mxu0 0.0
  %811 = vmatprep.subr.mxu0 0.0
  %812 = vmatpush1.msra.mxu0 0.0
  %813 = vmatprep.subr.mxu0 0.0
  %814 = vmatpush1.msra.mxu0 0.0
  %815 = vmatprep.subr.mxu0 0.0
  %816 = vmatpush1.msra.mxu0 0.0
  %817 = vmatprep.mubr.f32.mxu0 0.0
  %818 = vmatmul.mubr.f32.gmra.mrb[0].mxu0 %v751
  %v819 = vpop.f32.mrb[0].mxu0
  %v820 = vadd.f32 %v747, %v819
  %v821 = vpop.f32.mrb[0].mxu0
  %822 = vdwg.mxu0
  %v823 = vmax.f32 %v820, 0.0
  %824 = vset.pattern.permute.xlu0 116
  %825 = vperm.xlu0 %824, %v742
  %v826 = vpop.permute.xlu0 %825
  %828 = vrot.lane.b32.xlu0 %v742, 28
  %v829 = vpop.permute.xlu0 %828
  %v830 = vsel %vm30, %v829, 0
  %832 = vmatprep.subr.mxu0 0.0
  %833 = vmatpush1.msra.mxu0 %v823
  %834 = vmatprep.subr.mxu0 0.0
  %835 = vmatpush1.msra.mxu0 0.0
  %836 = vmatprep.subr.mxu0 0.0
  %837 = vmatpush1.msra.mxu0 0.0
  %838 = vmatprep.subr.mxu0 0.0
  %839 = vmatpush1.msra.mxu0 0.0
  %840 = vmatprep.subr.mxu0 0.0
  %841 = vmatpush1.msra.mxu0 0.0
  %842 = vmatprep.subr.mxu0 0.0
  %843 = vmatpush1.msra.mxu0 0.0
  %844 = vmatprep.subr.mxu0 0.0
  %845 = vmatpush1.msra.mxu0 0.0
  %846 = vmatprep.subr.mxu0 0.0
  %847 = vmatpush1.msra.mxu0 0.0
  %848 = vmatprep.subr.mxu0 0.0
  %849 = vmatpush1.msra.mxu0 0.0
  %850 = vmatprep.subr.mxu0 0.0
  %851 = vmatpush1.msra.mxu0 0.0
  %852 = vmatprep.subr.mxu0 0.0
  %853 = vmatpush1.msra.mxu0 0.0
  %854 = vmatprep.subr.mxu0 0.0
  %855 = vmatpush1.msra.mxu0 0.0
  %856 = vmatprep.subr.mxu0 0.0
  %857 = vmatpush1.msra.mxu0 0.0
  %858 = vmatprep.subr.mxu0 0.0
  %859 = vmatpush1.msra.mxu0 0.0
  %860 = vmatprep.subr.mxu0 0.0
  %861 = vmatpush1.msra.mxu0 0.0
  %862 = vmatprep.subr.mxu0 0.0
  %863 = vmatpush1.msra.mxu0 0.0
  %864 = vmatprep.subr.mxu0 0.0
  %865 = vmatpush1.msra.mxu0 0.0
  %866 = vmatprep.subr.mxu0 0.0
  %867 = vmatpush1.msra.mxu0 0.0
  %868 = vmatprep.subr.mxu0 0.0
  %869 = vmatpush1.msra.mxu0 0.0
  %870 = vmatprep.subr.mxu0 0.0
  %871 = vmatpush1.msra.mxu0 0.0
  %872 = vmatprep.subr.mxu0 0.0
  %873 = vmatpush1.msra.mxu0 0.0
  %874 = vmatprep.subr.mxu0 0.0
  %875 = vmatpush1.msra.mxu0 0.0
  %876 = vmatprep.subr.mxu0 0.0
  %877 = vmatpush1.msra.mxu0 0.0
  %878 = vmatprep.subr.mxu0 0.0
  %879 = vmatpush1.msra.mxu0 0.0
  %880 = vmatprep.subr.mxu0 0.0
  %881 = vmatpush1.msra.mxu0 0.0
  %882 = vmatprep.subr.mxu0 0.0
  %883 = vmatpush1.msra.mxu0 0.0
  %884 = vmatprep.subr.mxu0 0.0
  %885 = vmatpush1.msra.mxu0 0.0
  %886 = vmatprep.subr.mxu0 0.0
  %887 = vmatpush1.msra.mxu0 0.0
  %888 = vmatprep.subr.mxu0 0.0
  %889 = vmatpush1.msra.mxu0 0.0
  %890 = vmatprep.subr.mxu0 0.0
  %891 = vmatpush1.msra.mxu0 0.0
  %892 = vmatprep.subr.mxu0 0.0
  %893 = vmatpush1.msra.mxu0 0.0
  %894 = vmatprep.subr.mxu0 0.0
  %895 = vmatpush1.msra.mxu0 0.0
  %896 = vmatprep.mubr.f32.mxu0 0.0
  %897 = vmatmul.mubr.f32.gmra.mrb[0].mxu0 %v830
  %v898 = vpop.f32.mrb[0].mxu0
  %v899 = vadd.f32 %v826, %v898
  %v900 = vpop.f32.mrb[0].mxu0
  %901 = vdwg.mxu0
  %v902 = vrot.slane %v899, 4
  %v903 = vmax.f32 %v899, %v902
  %v904 = vrot.slane %v903, 2
  %v905 = vmax.f32 %v903, %v904
  %v906 = vrot.slane %v905, 1
  %v907 = vmax.f32 %v905, %v906
  %v908 = vsub.f32 %v899, %v907
  %v909 = vmul.f32 %v908, 1.442695
  %v910 = vpow.pop %v909
  %v911 = vrot.slane %v910, 4
  %v912 = vadd.f32 %v910, %v911
  %v913 = vrot.slane %v912, 2
  %v914 = vadd.f32 %v912, %v913
  %v915 = vrot.slane %v914, 1
  %v916 = vadd.f32 %v914, %v915
  %v917 = vrcp.pop %v916
  %v918 = vmul.f32 %v910, %v917
  %vm919 = vcmp.eq.s32.totalorder %v118, 0
  %920 = vrot.lane.b32.xlu0 %v918, 1
  %v921 = vpop.permute.xlu0 %920
  %v922 = vsel %vm919, 1.0, %v921
  %923 = vst [vmem:[%s3] sm:$0xff] %v922
  // Predicated region
  $region14: #{better_wavenet_decoder.1} parent=0 // pred_check
    _
  $region15: #{better_wavenet_decoder.1} parent=0 // pred_check_branch
    %925 = sbr.rel (0) target = $region17
  $region16: #{better_wavenet_decoder.1} parent=0 // pred_region
    _
  $region17: #{better_wavenet_decoder.1} parent=0 // pred_fallthru
    _
  // Predicated region
  $region18: #{better_wavenet_decoder.1} parent=0 // pred_check
    _
  $region19: #{better_wavenet_decoder.1} parent=0 // pred_check_branch
    %927 = sbr.rel (0) target = $region21
  $region20: #{better_wavenet_decoder.1} parent=0 // pred_region
    _
  $region21: #{better_wavenet_decoder.1} parent=0 // pred_fallthru
    _

</llo_original>
